<compile_context>
chip_gen: v6e
topology: v6e:2x2x1
jax: 0.10.0
libtpu: 0.0.40
codegen_flags: <defaults>
</compile_context>

<pallas_src>
import jax
import jax.numpy as jnp
from jax.experimental import pallas as pl
from jax.experimental.pallas import tpu as pltpu


def _round_up(n, m):
    return ((n + m - 1) // m) * m


def _choose_tile_b(batch):
    """Batch-tile policy (see perf review).

    - tile_b == batch (single grid step) for small/medium batches; the
      (1, tile_b) output block is legal because tile_b equals the full dim.
    - For large batches: ~<=2048 rows per tile, a multiple of 128 (lane-dense
      output block + sublane-of-8 rule), and an even tile count so both v7x
      TensorCores get work from the "parallel" batch axis.
    """
    if batch <= 512:
        return batch
    num_tiles = max(2, -(-batch // 2048))
    num_tiles += num_tiles % 2          # even tile count for the 2-TC split
    return min(2048, _round_up(-(-batch // num_tiles), 128))


def qnetwork_kernel(x_ref, a_ref, w1x_ref, w1a_ref, b1_ref,
                    w2_ref, b2_ref, w3_ref, b3_ref, out_ref):
    # fc1 (no activation, as in the PyTorch module).  The concat is folded into
    # two matmuls on the pre-split weight.  Kept fully in f32: raw observations
    # / actions keep full precision (perf-review correctness concern) and the
    # kernel is HBM/overhead bound, so the f32 MXU passes are free.
    h1 = (jnp.dot(x_ref[...], w1x_ref[...], preferred_element_type=jnp.float32)
          + jnp.dot(a_ref[...], w1a_ref[...], preferred_element_type=jnp.float32)
          + b1_ref[...])

    # fc2 + tanh: w2 is pre-cast to bf16 at init (no per-tile weight casts);
    # bf16 x bf16 MXU operands with f32 accumulation.  Bias add + tanh stay in
    # f32 (safe on v5e, where VPU/EUP have no bf16).
    h2 = jnp.tanh(
        jnp.dot(h1.astype(jnp.bfloat16), w2_ref[...],
                preferred_element_type=jnp.float32)
        + b2_ref[...])

    # fc3 (64 -> 1): contract w3 (1, 64) with h2 (tile_b, 64) over the feature
    # axis so the result is already a lane-dense (1, tile_b) row -- no
    # (tile_b, 1) narrow store and no explicit transpose/relayout.
    q = jax.lax.dot_general(
        w3_ref[...], h2,
        dimension_numbers=(((1,), (1,)), ((), ())),
        preferred_element_type=jnp.float32) + b3_ref[...]
    out_ref[...] = q.astype(out_ref.dtype)


def qnetwork_forward(x, a, params):
    """x: (B, obs_dim) f32, a: (B, act_dim) f32 -> (B, 1) f32."""
    w1x, w1a, b1, w2, b2, w3_row, b3 = params
    B, obs_dim = x.shape
    act_dim = a.shape[1]
    in_dim = obs_dim + act_dim

    tile_b = _choose_tile_b(B)
    grid = (pl.cdiv(B, tile_b),)

    const = lambda arr: pl.BlockSpec(arr.shape, lambda i: (0, 0))

    in_specs = [
        pl.BlockSpec((tile_b, obs_dim), lambda i: (i, 0)),   # x   (batch-tiled)
        pl.BlockSpec((tile_b, act_dim), lambda i: (i, 0)),   # a   (batch-tiled)
        const(w1x), const(w1a), const(b1),                   # VMEM-resident
        const(w2), const(b2),
        const(w3_row), const(b3),
    ]
    # Lane-dense output: (1, B) row with block (1, tile_b); reshaped below.
    out_specs = pl.BlockSpec((1, tile_b), lambda i: (0, i))

    flops = 2 * B * (in_dim * 256 + 256 * 64 + 64 * 1)
    transcendentals = B * 64
    weight_bytes = 4 * (in_dim * 256 + 256 + 64 + 64 + 1) + 2 * (256 * 64)
    bytes_accessed = 4 * B * (obs_dim + act_dim + 1) + weight_bytes

    out_row = pl.pallas_call(
        qnetwork_kernel,
        out_shape=jax.ShapeDtypeStruct((1, B), jnp.float32),
        grid=grid,
        in_specs=in_specs,
        out_specs=out_specs,
        compiler_params=pltpu.CompilerParams(
            dimension_semantics=("parallel",),
            vmem_limit_bytes=32 << 20),
        cost_estimate=pl.CostEstimate(
            flops=flops,
            transcendentals=transcendentals,
            bytes_accessed=bytes_accessed),
    )(x, a, w1x, w1a, b1, w2, b2, w3_row, b3)
    return out_row.reshape(B, 1)


def init_params(key, obs_dim, act_dim):
    """nn.Linear-style U[-1/sqrt(fan_in), +1/sqrt(fan_in)] init.

    fc1's weight is generated at full fan_in (obs+act) and split into the x / a
    halves (the kernel never needs the concat); fc2's weight is pre-cast to
    bf16 once; fc3's weight is stored as a (1, 64) f32 row.
    """
    def linear(k, fan_in, fan_out):
        kw, kb = jax.random.split(k)
        bound = 1.0 / (float(fan_in) ** 0.5)
        w = jax.random.uniform(kw, (fan_in, fan_out), jnp.float32,
                               minval=-bound, maxval=bound)
        b = jax.random.uniform(kb, (1, fan_out), jnp.float32,
                               minval=-bound, maxval=bound)
        return w, b

    in_dim = obs_dim + act_dim
    k1, k2, k3 = jax.random.split(key, 3)
    w1, b1 = linear(k1, in_dim, 256)
    w2, b2 = linear(k2, 256, 64)
    w3, b3 = linear(k3, 64, 1)

    w1x, w1a = w1[:obs_dim], w1[obs_dim:]     # split once; concat never needed
    w2_bf16 = w2.astype(jnp.bfloat16)         # pre-cast once (perf review)
    w3_row = w3.T                             # (1, 64) f32
    return (w1x, w1a, b1, w2_bf16, b2, w3_row, b3)


def reference_forward(x, a, params):
    w1x, w1a, b1, w2, b2, w3_row, b3 = params
    h = x @ w1x + a @ w1a + b1
    h = jnp.tanh(h @ w2.astype(jnp.float32) + b2)
    return h @ w3_row.T + b3


if __name__ == "__main__":
    key = jax.random.PRNGKey(0)
    k_x, k_a, k_p = jax.random.split(key, 3)

    batch, obs_dim, act_dim = 8, 16, 8
    x = jax.random.normal(k_x, (batch, obs_dim), jnp.float32)
    a = jax.random.normal(k_a, (batch, act_dim), jnp.float32)
    params = init_params(k_p, obs_dim, act_dim)

    q = qnetwork_forward(x, a, params)
    q = jax.block_until_ready(q)

    q_ref = reference_forward(x, a, params)
    assert q.shape == (batch, 1)
    # Only fc2 runs with bf16 operands (f32 accumulation); fc1/fc3 are full f32.
    assert jnp.allclose(q, q_ref, atol=1e-2, rtol=1e-2), "mismatch vs reference"

    print("KERNEL_OK")
</pallas_src>

<mosaic_0001>
module attributes {stable_mosaic.version = 11 : i64} {
  func.func @qnetwork_kernel(%arg0: i32, %arg1: memref<8x16xf32, #tpu.memory_space<vmem>>, %arg2: memref<8x8xf32, #tpu.memory_space<vmem>>, %arg3: memref<16x256xf32, #tpu.memory_space<vmem>>, %arg4: memref<8x256xf32, #tpu.memory_space<vmem>>, %arg5: memref<1x256xf32, #tpu.memory_space<vmem>>, %arg6: memref<256x64xbf16, #tpu.memory_space<vmem>>, %arg7: memref<1x64xf32, #tpu.memory_space<vmem>>, %arg8: memref<1x64xf32, #tpu.memory_space<vmem>>, %arg9: memref<1x1xf32, #tpu.memory_space<vmem>>, %arg10: memref<1x8xf32, #tpu.memory_space<vmem>>) attributes {dimension_semantics = [#tpu.dimension_semantics<parallel>], iteration_bounds = array<i64: 1>, scalar_prefetch = 0 : i64, scratch_operands = 0 : i64, tpu.core_type = #tpu.core_type<tc>, window_params = [{transform_indices = @transform_0, window_bounds = array<i64: 8, 16>}, {transform_indices = @transform_1, window_bounds = array<i64: 8, 8>}, {pipeline_mode = #tpu.pipeline_mode<synchronous>, transform_indices = @transform_2, window_bounds = array<i64: 16, 256>}, {pipeline_mode = #tpu.pipeline_mode<synchronous>, transform_indices = @transform_3, window_bounds = array<i64: 8, 256>}, {pipeline_mode = #tpu.pipeline_mode<synchronous>, transform_indices = @transform_4, window_bounds = array<i64: 1, 256>}, {pipeline_mode = #tpu.pipeline_mode<synchronous>, transform_indices = @transform_5, window_bounds = array<i64: 256, 64>}, {pipeline_mode = #tpu.pipeline_mode<synchronous>, transform_indices = @transform_6, window_bounds = array<i64: 1, 64>}, {pipeline_mode = #tpu.pipeline_mode<synchronous>, transform_indices = @transform_7, window_bounds = array<i64: 1, 64>}, {pipeline_mode = #tpu.pipeline_mode<synchronous>, transform_indices = @transform_8, window_bounds = array<i64: 1, 1>}, {transform_indices = @transform_9, window_bounds = array<i64: 1, 8>}]} {
    %c0 = arith.constant 0 : index
    %c0_0 = arith.constant 0 : index
    %0 = vector.load %arg1[%c0, %c0_0] : memref<8x16xf32, #tpu.memory_space<vmem>>, vector<8x16xf32>
    %c0_1 = arith.constant 0 : index
    %c0_2 = arith.constant 0 : index
    %1 = vector.load %arg3[%c0_1, %c0_2] : memref<16x256xf32, #tpu.memory_space<vmem>>, vector<16x256xf32>
    %cst = arith.constant dense<0.000000e+00> : vector<8x256xf32>
    %2 = tpu.matmul %0, %1, %cst {dimension_numbers = #tpu.dot_dimension_numbers<[1], [0], [0], [1], [0, 0, 1, 1], [], []>} : vector<8x16xf32>, vector<16x256xf32>, vector<8x256xf32> -> vector<8x256xf32>
    %c0_3 = arith.constant 0 : index
    %c0_4 = arith.constant 0 : index
    %3 = vector.load %arg2[%c0_3, %c0_4] : memref<8x8xf32, #tpu.memory_space<vmem>>, vector<8x8xf32>
    %c0_5 = arith.constant 0 : index
    %c0_6 = arith.constant 0 : index
    %4 = vector.load %arg4[%c0_5, %c0_6] : memref<8x256xf32, #tpu.memory_space<vmem>>, vector<8x256xf32>
    %cst_7 = arith.constant dense<0.000000e+00> : vector<8x256xf32>
    %5 = tpu.matmul %3, %4, %cst_7 {dimension_numbers = #tpu.dot_dimension_numbers<[1], [0], [0], [1], [0, 0, 1, 1], [], []>} : vector<8x8xf32>, vector<8x256xf32>, vector<8x256xf32> -> vector<8x256xf32>
    %6 = arith.addf %2, %5 : vector<8x256xf32>
    %c0_8 = arith.constant 0 : index
    %c0_9 = arith.constant 0 : index
    %7 = vector.load %arg5[%c0_8, %c0_9] : memref<1x256xf32, #tpu.memory_space<vmem>>, vector<1x256xf32>
    %8 = vector.broadcast %7 : vector<1x256xf32> to vector<8x256xf32>
    %9 = arith.addf %6, %8 : vector<8x256xf32>
    %10 = arith.truncf %9 : vector<8x256xf32> to vector<8x256xbf16>
    %c0_10 = arith.constant 0 : index
    %c0_11 = arith.constant 0 : index
    %11 = vector.load %arg6[%c0_10, %c0_11] : memref<256x64xbf16, #tpu.memory_space<vmem>>, vector<256x64xbf16>
    %cst_12 = arith.constant dense<0.000000e+00> : vector<8x64xf32>
    %12 = tpu.matmul %10, %11, %cst_12 {dimension_numbers = #tpu.dot_dimension_numbers<[1], [0], [0], [1], [0, 0, 1, 1], [], []>} : vector<8x256xbf16>, vector<256x64xbf16>, vector<8x64xf32> -> vector<8x64xf32>
    %c0_13 = arith.constant 0 : index
    %c0_14 = arith.constant 0 : index
    %13 = vector.load %arg7[%c0_13, %c0_14] : memref<1x64xf32, #tpu.memory_space<vmem>>, vector<1x64xf32>
    %14 = vector.broadcast %13 : vector<1x64xf32> to vector<8x64xf32>
    %15 = arith.addf %12, %14 : vector<8x64xf32>
    %16 = math.tanh %15 : vector<8x64xf32>
    %c0_15 = arith.constant 0 : index
    %c0_16 = arith.constant 0 : index
    %17 = vector.load %arg8[%c0_15, %c0_16] : memref<1x64xf32, #tpu.memory_space<vmem>>, vector<1x64xf32>
    %cst_17 = arith.constant dense<0.000000e+00> : vector<1x8xf32>
    %18 = tpu.matmul %17, %16, %cst_17 {dimension_numbers = #tpu.dot_dimension_numbers<[1], [1], [0], [0], [0, 0, 1, 0], [], []>} : vector<1x64xf32>, vector<8x64xf32>, vector<1x8xf32> -> vector<1x8xf32>
    %c0_18 = arith.constant 0 : index
    %c0_19 = arith.constant 0 : index
    %19 = vector.load %arg9[%c0_18, %c0_19] : memref<1x1xf32, #tpu.memory_space<vmem>>, vector<1x1xf32>
    %20 = vector.broadcast %19 : vector<1x1xf32> to vector<1x8xf32>
    %21 = arith.addf %18, %20 : vector<1x8xf32>
    %c0_20 = arith.constant 0 : index
    %c0_21 = arith.constant 0 : index
    %22 = vector.load %arg10[%c0_20, %c0_21] : memref<1x8xf32, #tpu.memory_space<vmem>>, vector<1x8xf32>
    tpu.vector_store %arg10[%c0_20, %c0_21], %21 {strides = array<i32>} : memref<1x8xf32, #tpu.memory_space<vmem>>, vector<1x8xf32>,
    return
  }
  func.func @transform_0(%arg0: i32) -> (i32, i32) {
    %c0_i32 = arith.constant 0 : i32
    %c0_i32_0 = arith.constant 0 : i32
    return %arg0, %c0_i32 : i32, i32
  }
  func.func @transform_1(%arg0: i32) -> (i32, i32) {
    %c0_i32 = arith.constant 0 : i32
    %c0_i32_0 = arith.constant 0 : i32
    return %arg0, %c0_i32 : i32, i32
  }
  func.func @transform_2(%arg0: i32) -> (i32, i32) {
    %c0_i32 = arith.constant 0 : i32
    %c0_i32_0 = arith.constant 0 : i32
    %c0_i32_1 = arith.constant 0 : i32
    return %c0_i32, %c0_i32_0 : i32, i32
  }
  func.func @transform_3(%arg0: i32) -> (i32, i32) {
    %c0_i32 = arith.constant 0 : i32
    %c0_i32_0 = arith.constant 0 : i32
    %c0_i32_1 = arith.constant 0 : i32
    return %c0_i32, %c0_i32_0 : i32, i32
  }
  func.func @transform_4(%arg0: i32) -> (i32, i32) {
    %c0_i32 = arith.constant 0 : i32
    %c0_i32_0 = arith.constant 0 : i32
    %c0_i32_1 = arith.constant 0 : i32
    return %c0_i32, %c0_i32_0 : i32, i32
  }
  func.func @transform_5(%arg0: i32) -> (i32, i32) {
    %c0_i32 = arith.constant 0 : i32
    %c0_i32_0 = arith.constant 0 : i32
    %c0_i32_1 = arith.constant 0 : i32
    return %c0_i32, %c0_i32_0 : i32, i32
  }
  func.func @transform_6(%arg0: i32) -> (i32, i32) {
    %c0_i32 = arith.constant 0 : i32
    %c0_i32_0 = arith.constant 0 : i32
    %c0_i32_1 = arith.constant 0 : i32
    return %c0_i32, %c0_i32_0 : i32, i32
  }
  func.func @transform_7(%arg0: i32) -> (i32, i32) {
    %c0_i32 = arith.constant 0 : i32
    %c0_i32_0 = arith.constant 0 : i32
    %c0_i32_1 = arith.constant 0 : i32
    return %c0_i32, %c0_i32_0 : i32, i32
  }
  func.func @transform_8(%arg0: i32) -> (i32, i32) {
    %c0_i32 = arith.constant 0 : i32
    %c0_i32_0 = arith.constant 0 : i32
    %c0_i32_1 = arith.constant 0 : i32
    return %c0_i32, %c0_i32_0 : i32, i32
  }
  func.func @transform_9(%arg0: i32) -> (i32, i32) {
    %c0_i32 = arith.constant 0 : i32
    %c0_i32_0 = arith.constant 0 : i32
    return %c0_i32, %arg0 : i32, i32
  }
}

</mosaic_0001>

<llo_original>
// kernel: tpu_custom_call.1
$region0: #{tpu_custom_call.1}
  #allocation0 [shape = 'u32[]', space=smem, size = 0x4, offset = 0x4, fixed_abs, tag = 'smem constant byte address 0x4 - core index']
  #allocation1 [shape = 'u32[144,128]{1,0:T(1,128)}', space=vmem, size = 0x12000, scoped, tag = 'internal scratch']
  #allocation2 [shape = 'f32[1,1]{1,0:T(1,128)S(1)}', space=vmem, size = 0x200, scoped, tag = 'scoped memory for tpu_custom_call.1']
  %s0 = inlined_call_operand.vmem [shape: f32[8,16], index: 0, kind: input, shape index: {}]
  %s1 = inlined_call_operand.vmem [shape: f32[8,8], index: 1, kind: input, shape index: {}]
  %s2 = inlined_call_operand.vmem [shape: f32[16,256], index: 2, kind: input, shape index: {}]
  %s3 = inlined_call_operand.vmem [shape: f32[8,256], index: 3, kind: input, shape index: {}]
  %s4 = inlined_call_operand.vmem [shape: f32[1,256], index: 4, kind: input, shape index: {}]
  %s5 = inlined_call_operand.vmem [shape: bf16[256,64], index: 5, kind: input, shape index: {}]
  %s6 = inlined_call_operand.vmem [shape: f32[1,64], index: 6, kind: input, shape index: {}]
  %s7 = inlined_call_operand.vmem [shape: f32[1,64], index: 7, kind: input, shape index: {}]
  %s8 = inlined_call_operand.<no memory space> [shape: f32[1,1], index: 8, kind: input, shape index: {}]
  %s9 = inlined_call_operand.hbm [shape: f32[1,8], index: 9, kind: output, shape index: {}]
  %s10 = sld [smem:[#allocation0]]
  $region46: #{tpu_custom_call.1} parent=0
    _
  %s12 = ssub.s32 1, %s10
  %s13 = scalar_select 0, %s12, %s10
  %v14 = vstv %s8
  %15 = vst [vmem:[#allocation2] sm:$0x1] %v14
  $region1: #{tpu_custom_call.1} parent=0
    #allocation3 [shape = 'u8[512]{0}', space=vmem, size = 0x400, scoped, tag = 'output window, operand 0, single buffered']
    #allocation4 [shape = 's32[1]{0}', space=sflag, size = 0x4, scoped, tag = 'scoped memory for tpu_custom_call.1']
    %16 = vsyncpa [#allocation4], 0
    // Predicated region
    $region2: #{tpu_custom_call.1} parent=1 // pred_check
      _
    $region3: #{tpu_custom_call.1} parent=1 // pred_check_branch
      %18 = sbr.rel (0) target = $region5
    $region4: #{tpu_custom_call.1} parent=1 // pred_region
      _
    $region5: #{tpu_custom_call.1} parent=1 // pred_fallthru
      _
    // Predicated region
    $region6: #{tpu_custom_call.1} parent=1 // pred_check
      _
    $region7: #{tpu_custom_call.1} parent=1 // pred_check_branch
      %20 = sbr.rel (0) target = $region9
    $region8: #{tpu_custom_call.1} parent=1 // pred_region
      _
    $region9: #{tpu_custom_call.1} parent=1 // pred_fallthru
      _
    // Predicated region
    $region10: #{tpu_custom_call.1} parent=1 // pred_check
      _
    $region11: #{tpu_custom_call.1} parent=1 // pred_check_branch
      %22 = sbr.rel (0) target = $region13
    $region12: #{tpu_custom_call.1} parent=1 // pred_region
      _
    $region13: #{tpu_custom_call.1} parent=1 // pred_fallthru
      _
    // Predicated region
    $region14: #{tpu_custom_call.1} parent=1 // pred_check
      _
    $region15: #{tpu_custom_call.1} parent=1 // pred_check_branch
      %24 = sbr.rel (0) target = $region17
    $region16: #{tpu_custom_call.1} parent=1 // pred_region
      _
    $region17: #{tpu_custom_call.1} parent=1 // pred_fallthru
      _
    // Predicated region
    $region18: #{tpu_custom_call.1} parent=1 // pred_check
      _
    $region19: #{tpu_custom_call.1} parent=1 // pred_check_branch
      %26 = sbr.rel (0) target = $region21
    $region20: #{tpu_custom_call.1} parent=1 // pred_region
      _
    $region21: #{tpu_custom_call.1} parent=1 // pred_fallthru
      _
    // Predicated region
    $region22: #{tpu_custom_call.1} parent=1 // pred_check
      _
    $region23: #{tpu_custom_call.1} parent=1 // pred_check_branch
      %28 = sbr.rel (0) target = $region25
    $region24: #{tpu_custom_call.1} parent=1 // pred_region
      _
    $region25: #{tpu_custom_call.1} parent=1 // pred_fallthru
      _
    // Predicated region
    $region26: #{tpu_custom_call.1} parent=1 // pred_check
      _
    $region27: #{tpu_custom_call.1} parent=1 // pred_check_branch
      %30 = sbr.rel (0) target = $region29
    $region28: #{tpu_custom_call.1} parent=1 // pred_region
      _
    $region29: #{tpu_custom_call.1} parent=1 // pred_fallthru
      _
    // Predicated region
    $region30: #{tpu_custom_call.1} parent=1 // pred_check
      _
    $region31: #{tpu_custom_call.1} parent=1 // pred_check_branch
      %32 = sbr.rel (0) target = $region33
    $region32: #{tpu_custom_call.1} parent=1 // pred_region
      _
    $region33: #{tpu_custom_call.1} parent=1 // pred_fallthru
      _
    // Predicated region
    $region34: #{tpu_custom_call.1} parent=1 // pred_check
      _
    $region35: #{tpu_custom_call.1} parent=1 // pred_check_branch
      %34 = sbr.rel (0) target = $region37
    $region36: #{tpu_custom_call.1} parent=1 // pred_region
      _
    $region37: #{tpu_custom_call.1} parent=1 // pred_fallthru
      _
    %v36 = vld [vmem:[%s0] sm:$0xff]
    %v37 = vld [vmem:[%s2] sm:$0xff]
    %v38 = vld [vmem:[%s2 + $0x8] sm:$0xff]
    %v39 = vld [vmem:[%s2 + $0x10] sm:$0xff]
    %v40 = vld [vmem:[%s2 + $0x18] sm:$0xff]
    %v41 = vld [vmem:[%s1] sm:$0xff]
    %v42 = vld [vmem:[%s3] sm:$0xff]
    %v43 = vld [vmem:[%s3 + $0x8] sm:$0xff]
    %vm44 = vcmask 64512
    %v46 = vsel %vm44, %v41, 0
    %48 = vmatprep.subr.mxu0 0.0
    %49 = vmatpush1.msra.mxu0 0.0
    %50 = vmatprep.subr.mxu0 0.0
    %51 = vmatpush1.msra.mxu0 0.0
    %52 = vmatprep.subr.mxu0 0.0
    %53 = vmatpush1.msra.mxu0 0.0
    %54 = vmatprep.subr.mxu0 0.0
    %55 = vmatpush1.msra.mxu0 0.0
    %56 = vmatprep.subr.mxu0 0.0
    %57 = vmatpush1.msra.mxu0 0.0
    %58 = vmatprep.subr.mxu0 0.0
    %59 = vmatpush1.msra.mxu0 0.0
    %60 = vmatprep.subr.mxu0 0.0
    %61 = vmatpush1.msra.mxu0 0.0
    %62 = vmatprep.subr.mxu0 0.0
    %63 = vmatpush1.msra.mxu0 0.0
    %64 = vmatprep.subr.mxu0 0.0
    %65 = vmatpush1.msra.mxu0 0.0
    %66 = vmatprep.subr.mxu0 0.0
    %67 = vmatpush1.msra.mxu0 0.0
    %68 = vmatprep.subr.mxu0 0.0
    %69 = vmatpush1.msra.mxu0 0.0
    %70 = vmatprep.subr.mxu0 0.0
    %71 = vmatpush1.msra.mxu0 0.0
    %72 = vmatprep.subr.mxu0 0.0
    %73 = vmatpush1.msra.mxu0 0.0
    %74 = vmatprep.subr.mxu0 0.0
    %75 = vmatpush1.msra.mxu0 0.0
    %76 = vmatprep.subr.mxu0 0.0
    %77 = vmatpush1.msra.mxu0 0.0
    %78 = vmatprep.subr.mxu0 %v43
    %79 = vmatpush1.msra.mxu0 %v42
    %80 = vmatprep.subr.mxu0 0.0
    %81 = vmatpush2.msra.mxu0 0.0
    %82 = vmatprep.subr.mxu0 0.0
    %83 = vmatpush2.msra.mxu0 0.0
    %84 = vmatprep.subr.mxu0 0.0
    %85 = vmatpush2.msra.mxu0 0.0
    %86 = vmatprep.subr.mxu0 0.0
    %87 = vmatpush2.msra.mxu0 0.0
    %88 = vmatprep.subr.mxu0 0.0
    %89 = vmatpush2.msra.mxu0 0.0
    %90 = vmatprep.subr.mxu0 0.0
    %91 = vmatpush2.msra.mxu0 0.0
    %92 = vmatprep.subr.mxu0 0.0
    %93 = vmatpush2.msra.mxu0 0.0
    %94 = vmatprep.subr.mxu0 0.0
    %95 = vmatpush2.msra.mxu0 0.0
    %96 = vmatprep.subr.mxu0 0.0
    %97 = vmatpush2.msra.mxu0 0.0
    %98 = vmatprep.subr.mxu0 0.0
    %99 = vmatpush2.msra.mxu0 0.0
    %100 = vmatprep.subr.mxu0 0.0
    %101 = vmatpush2.msra.mxu0 0.0
    %102 = vmatprep.subr.mxu0 0.0
    %103 = vmatpush2.msra.mxu0 0.0
    %104 = vmatprep.subr.mxu0 0.0
    %105 = vmatpush2.msra.mxu0 0.0
    %106 = vmatprep.subr.mxu0 0.0
    %107 = vmatpush2.msra.mxu0 0.0
    %108 = vmatprep.subr.mxu0 0.0
    %109 = vmatpush2.msra.mxu0 0.0
    %110 = vmatprep.subr.mxu0 0.0
    %111 = vmatpush2.msra.mxu0 0.0
    %112 = vmatprep.mubr.f32.mxu0 0.0
    %113 = vmatmul.mubr.f32.gmra.mxu0 %v46
    %v114 = vpop.f32.mrf.mxu0
    %v115 = vadd.f32 0.0, %v114
    %v116 = vpop.f32.mrf.mxu0
    %v117 = vadd.f32 0.0, %v116
    %118 = vdwg.mxu0
    %vm119 = vcmask 130048
    %v121 = vsel %vm119, %v36, 0
    %123 = vmatprep.subr.mxu0 0.0
    %124 = vmatpush1.msra.mxu0 0.0
    %125 = vmatprep.subr.mxu0 0.0
    %126 = vmatpush1.msra.mxu0 0.0
    %127 = vmatprep.subr.mxu0 0.0
    %128 = vmatpush1.msra.mxu0 0.0
    %129 = vmatprep.subr.mxu0 0.0
    %130 = vmatpush1.msra.mxu0 0.0
    %131 = vmatprep.subr.mxu0 0.0
    %132 = vmatpush1.msra.mxu0 0.0
    %133 = vmatprep.subr.mxu0 0.0
    %134 = vmatpush1.msra.mxu0 0.0
    %135 = vmatprep.subr.mxu0 0.0
    %136 = vmatpush1.msra.mxu0 0.0
    %137 = vmatprep.subr.mxu0 0.0
    %138 = vmatpush1.msra.mxu0 0.0
    %139 = vmatprep.subr.mxu0 0.0
    %140 = vmatpush1.msra.mxu0 0.0
    %141 = vmatprep.subr.mxu0 0.0
    %142 = vmatpush1.msra.mxu0 0.0
    %143 = vmatprep.subr.mxu0 0.0
    %144 = vmatpush1.msra.mxu0 0.0
    %145 = vmatprep.subr.mxu0 0.0
    %146 = vmatpush1.msra.mxu0 0.0
    %147 = vmatprep.subr.mxu0 0.0
    %148 = vmatpush1.msra.mxu0 0.0
    %149 = vmatprep.subr.mxu0 0.0
    %150 = vmatpush1.msra.mxu0 0.0
    %151 = vmatprep.subr.mxu0 %v40
    %152 = vmatpush1.msra.mxu0 %v39
    %153 = vmatprep.subr.mxu0 %v38
    %154 = vmatpush1.msra.mxu0 %v37
    %155 = vmatprep.subr.mxu0 0.0
    %156 = vmatpush2.msra.mxu0 0.0
    %157 = vmatprep.subr.mxu0 0.0
    %158 = vmatpush2.msra.mxu0 0.0
    %159 = vmatprep.subr.mxu0 0.0
    %160 = vmatpush2.msra.mxu0 0.0
    %161 = vmatprep.subr.mxu0 0.0
    %162 = vmatpush2.msra.mxu0 0.0
    %163 = vmatprep.subr.mxu0 0.0
    %164 = vmatpush2.msra.mxu0 0.0
    %165 = vmatprep.subr.mxu0 0.0
    %166 = vmatpush2.msra.mxu0 0.0
    %167 = vmatprep.subr.mxu0 0.0
    %168 = vmatpush2.msra.mxu0 0.0
    %169 = vmatprep.subr.mxu0 0.0
    %170 = vmatpush2.msra.mxu0 0.0
    %171 = vmatprep.subr.mxu0 0.0
    %172 = vmatpush2.msra.mxu0 0.0
    %173 = vmatprep.subr.mxu0 0.0
    %174 = vmatpush2.msra.mxu0 0.0
    %175 = vmatprep.subr.mxu0 0.0
    %176 = vmatpush2.msra.mxu0 0.0
    %177 = vmatprep.subr.mxu0 0.0
    %178 = vmatpush2.msra.mxu0 0.0
    %179 = vmatprep.subr.mxu0 0.0
    %180 = vmatpush2.msra.mxu0 0.0
    %181 = vmatprep.subr.mxu0 0.0
    %182 = vmatpush2.msra.mxu0 0.0
    %183 = vmatprep.subr.mxu0 0.0
    %184 = vmatpush2.msra.mxu0 0.0
    %185 = vmatprep.subr.mxu0 0.0
    %186 = vmatpush2.msra.mxu0 0.0
    %187 = vmatprep.mubr.f32.mxu0 0.0
    %188 = vmatmul.mubr.f32.gmra.mxu0 %v121
    %v189 = vpop.f32.mrf.mxu0
    %v190 = vadd.f32 %v115, %v189
    %v191 = vpop.f32.mrf.mxu0
    %v192 = vadd.f32 %v117, %v191
    %193 = vdwg.mxu0
    %v194 = vld [vmem:[%s4] sm:$0x3]
    %v196 = vlaneseq
    %v197 = vshrl.u32 %v196, 7
    %v198 = vsub.s32 0, %v197
    %v199 = vrot.slane %v194, %v198
    %v200 = vlaneseq
    %v201 = vshrl.u32 %v200, 7
    %v202 = vsub.s32 1, %v201
    %v203 = vrot.slane %v194, %v202
    %v206 = vadd.f32 %v190, %v199
    %v207 = vadd.f32 %v192, %v203
    %v208 = vpack.c.bf16 %v206, %v206
    %v209 = vpack.c.bf16 %v207, %v207
    %v210 = vld [vmem:[%s5] sm:$0xf]
    %v211 = vld [vmem:[%s5 + $0x4] sm:$0xf]
    %v212 = vld [vmem:[%s5 + $0x8] sm:$0xf]
    %v213 = vld [vmem:[%s5 + $0xc] sm:$0xf]
    %v214 = vld [vmem:[%s5 + $0x10] sm:$0xf]
    %v215 = vld [vmem:[%s5 + $0x14] sm:$0xf]
    %v216 = vld [vmem:[%s5 + $0x18] sm:$0xf]
    %v217 = vld [vmem:[%s5 + $0x1c] sm:$0xf]
    %v218 = vld [vmem:[%s5 + $0x20] sm:$0xf]
    %v219 = vld [vmem:[%s5 + $0x24] sm:$0xf]
    %v220 = vld [vmem:[%s5 + $0x28] sm:$0xf]
    %v221 = vld [vmem:[%s5 + $0x2c] sm:$0xf]
    %v222 = vld [vmem:[%s5 + $0x30] sm:$0xf]
    %v223 = vld [vmem:[%s5 + $0x34] sm:$0xf]
    %v224 = vld [vmem:[%s5 + $0x38] sm:$0xf]
    %v225 = vld [vmem:[%s5 + $0x3c] sm:$0xf]
    %v226 = vld [vmem:[%s5 + $0x40] sm:$0xf]
    %v227 = vld [vmem:[%s5 + $0x44] sm:$0xf]
    %v228 = vld [vmem:[%s5 + $0x48] sm:$0xf]
    %v229 = vld [vmem:[%s5 + $0x4c] sm:$0xf]
    %v230 = vld [vmem:[%s5 + $0x50] sm:$0xf]
    %v231 = vld [vmem:[%s5 + $0x54] sm:$0xf]
    %v232 = vld [vmem:[%s5 + $0x58] sm:$0xf]
    %v233 = vld [vmem:[%s5 + $0x5c] sm:$0xf]
    %v234 = vld [vmem:[%s5 + $0x60] sm:$0xf]
    %v235 = vld [vmem:[%s5 + $0x64] sm:$0xf]
    %v236 = vld [vmem:[%s5 + $0x68] sm:$0xf]
    %v237 = vld [vmem:[%s5 + $0x6c] sm:$0xf]
    %v238 = vld [vmem:[%s5 + $0x70] sm:$0xf]
    %v239 = vld [vmem:[%s5 + $0x74] sm:$0xf]
    %v240 = vld [vmem:[%s5 + $0x78] sm:$0xf]
    %v241 = vld [vmem:[%s5 + $0x7c] sm:$0xf]
    %v242 = vld [vmem:[%s6] sm:$0x1]
    %v244 = vlaneseq
    %v245 = vshrl.u32 %v244, 7
    %v246 = vsub.s32 0, %v245
    %v247 = vrot.slane %v242, %v246
    %v281 = vunpack.c.l.b16 %v210
    %v282 = vunpack.c.l.b16 %v211
    %v283 = vunpack.c.l.b16 %v212
    %v284 = vunpack.c.l.b16 %v213
    %v285 = vunpack.c.l.b16 %v214
    %v286 = vunpack.c.l.b16 %v215
    %v287 = vunpack.c.l.b16 %v216
    %v288 = vunpack.c.l.b16 %v217
    %v289 = vunpack.c.l.b16 %v218
    %v290 = vunpack.c.l.b16 %v219
    %v291 = vunpack.c.l.b16 %v220
    %v292 = vunpack.c.l.b16 %v221
    %v293 = vunpack.c.l.b16 %v222
    %v294 = vunpack.c.l.b16 %v223
    %v295 = vunpack.c.l.b16 %v224
    %v296 = vunpack.c.l.b16 %v225
    %v297 = vunpack.c.l.b16 %v226
    %v298 = vunpack.c.l.b16 %v227
    %v299 = vunpack.c.l.b16 %v228
    %v300 = vunpack.c.l.b16 %v229
    %v301 = vunpack.c.l.b16 %v230
    %v302 = vunpack.c.l.b16 %v231
    %v303 = vunpack.c.l.b16 %v232
    %v304 = vunpack.c.l.b16 %v233
    %v305 = vunpack.c.l.b16 %v234
    %v306 = vunpack.c.l.b16 %v235
    %v307 = vunpack.c.l.b16 %v236
    %v308 = vunpack.c.l.b16 %v237
    %v309 = vunpack.c.l.b16 %v238
    %v310 = vunpack.c.l.b16 %v239
    %v311 = vunpack.c.l.b16 %v240
    %v312 = vunpack.c.l.b16 %v241
    %v313 = vpack.c.b16 %v282, %v281
    %v314 = vpack.c.b16 %v284, %v283
    %v315 = vpack.c.b16 %v286, %v285
    %v316 = vpack.c.b16 %v288, %v287
    %v317 = vpack.c.b16 %v290, %v289
    %v318 = vpack.c.b16 %v292, %v291
    %v319 = vpack.c.b16 %v294, %v293
    %v320 = vpack.c.b16 %v296, %v295
    %v321 = vpack.c.b16 %v298, %v297
    %v322 = vpack.c.b16 %v300, %v299
    %v323 = vpack.c.b16 %v302, %v301
    %v324 = vpack.c.b16 %v304, %v303
    %v325 = vpack.c.b16 %v306, %v305
    %v326 = vpack.c.b16 %v308, %v307
    %v327 = vpack.c.b16 %v310, %v309
    %v328 = vpack.c.b16 %v312, %v311
    %345 = vmatprep.subr.bf16.mxu0 0
    %346 = vmatpush1.bf16.msra.mxu0 %v320
    %347 = vmatprep.subr.bf16.mxu0 0
    %348 = vmatpush1.bf16.msra.mxu0 %v319
    %349 = vmatprep.subr.bf16.mxu0 0
    %350 = vmatpush1.bf16.msra.mxu0 %v318
    %351 = vmatprep.subr.bf16.mxu0 0
    %352 = vmatpush1.bf16.msra.mxu0 %v317
    %353 = vmatprep.subr.bf16.mxu0 0
    %354 = vmatpush1.bf16.msra.mxu0 %v316
    %355 = vmatprep.subr.bf16.mxu0 0
    %356 = vmatpush1.bf16.msra.mxu0 %v315
    %357 = vmatprep.subr.bf16.mxu0 0
    %358 = vmatpush1.bf16.msra.mxu0 %v314
    %359 = vmatprep.subr.bf16.mxu0 0
    %360 = vmatpush1.bf16.msra.mxu0 %v313
    %361 = vmatprep.subr.bf16.mxu0 0
    %362 = vmatpush2.bf16.msra.mxu0 %v328
    %363 = vmatprep.subr.bf16.mxu0 0
    %364 = vmatpush2.bf16.msra.mxu0 %v327
    %365 = vmatprep.subr.bf16.mxu0 0
    %366 = vmatpush2.bf16.msra.mxu0 %v326
    %367 = vmatprep.subr.bf16.mxu0 0
    %368 = vmatpush2.bf16.msra.mxu0 %v325
    %369 = vmatprep.subr.bf16.mxu0 0
    %370 = vmatpush2.bf16.msra.mxu0 %v324
    %371 = vmatprep.subr.bf16.mxu0 0
    %372 = vmatpush2.bf16.msra.mxu0 %v323
    %373 = vmatprep.subr.bf16.mxu0 0
    %374 = vmatpush2.bf16.msra.mxu0 %v322
    %375 = vmatprep.subr.bf16.mxu0 0
    %376 = vmatpush2.bf16.msra.mxu0 %v321
    %377 = vmatprep.mubr.bf16.mxu0 %v209
    %378 = vmatmul.mubr.bf16.gmra.mxu0 %v208
    %v379 = vpop.f32.mrf.mxu0
    %v380 = vadd.f32 %v247, %v379
    %v381 = vpop.f32.mrf.mxu0
    %v382 = vpop.f32.mrf.mxu0
    %v383 = vpop.f32.mrf.mxu0
    %384 = vdwg.mxu0
    %v385 = vtanh.pop %v380
    %v386 = vld [vmem:[%s7] sm:$0x1]
    %v387 = vld [vmem:[#allocation2] sm:$0x1]
    %389 = vset.pattern.permute.xlu0 0
    %390 = vperm.xlu0 %389, %v387
    %v391 = vpop.permute.xlu0 %390
    %v393 = vlaneseq
    %v394 = vshrl.u32 %v393, 7
    %v395 = vsub.s32 0, %v394
    %v396 = vrot.slane %v391, %v395
    %vm397 = vcmask 523264
    %v399 = vsel %vm397, %v386, 0
    %v402 = vsel %vm397, %v385, 0
    %404 = vmatprep.subr.mxu0 0.0
    %405 = vmatpush1.xpose.msra.mxu0 0.0
    %406 = vmatprep.subr.mxu0 0.0
    %407 = vmatpush1.xpose.msra.mxu0 0.0
    %408 = vmatprep.subr.mxu0 0.0
    %409 = vmatpush1.xpose.msra.mxu0 0.0
    %410 = vmatprep.subr.mxu0 0.0
    %411 = vmatpush1.xpose.msra.mxu0 0.0
    %412 = vmatprep.subr.mxu0 0.0
    %413 = vmatpush1.xpose.msra.mxu0 0.0
    %414 = vmatprep.subr.mxu0 0.0
    %415 = vmatpush1.xpose.msra.mxu0 0.0
    %416 = vmatprep.subr.mxu0 0.0
    %417 = vmatpush1.xpose.msra.mxu0 0.0
    %418 = vmatprep.subr.mxu0 0.0
    %419 = vmatpush1.xpose.msra.mxu0 0.0
    %420 = vmatprep.subr.mxu0 0.0
    %421 = vmatpush1.xpose.msra.mxu0 0.0
    %422 = vmatprep.subr.mxu0 0.0
    %423 = vmatpush1.xpose.msra.mxu0 0.0
    %424 = vmatprep.subr.mxu0 0.0
    %425 = vmatpush1.xpose.msra.mxu0 0.0
    %426 = vmatprep.subr.mxu0 0.0
    %427 = vmatpush1.xpose.msra.mxu0 0.0
    %428 = vmatprep.subr.mxu0 0.0
    %429 = vmatpush1.xpose.msra.mxu0 0.0
    %430 = vmatprep.subr.mxu0 0.0
    %431 = vmatpush1.xpose.msra.mxu0 0.0
    %432 = vmatprep.subr.mxu0 0.0
    %433 = vmatpush1.xpose.msra.mxu0 0.0
    %434 = vmatprep.subr.mxu0 0.0
    %435 = vmatpush1.xpose.msra.mxu0 %v402
    %436 = vmatprep.subr.mxu0 0.0
    %437 = vmatpush2.xpose.msra.mxu0 0.0
    %438 = vmatprep.subr.mxu0 0.0
    %439 = vmatpush2.xpose.msra.mxu0 0.0
    %440 = vmatprep.subr.mxu0 0.0
    %441 = vmatpush2.xpose.msra.mxu0 0.0
    %442 = vmatprep.subr.mxu0 0.0
    %443 = vmatpush2.xpose.msra.mxu0 0.0
    %444 = vmatprep.subr.mxu0 0.0
    %445 = vmatpush2.xpose.msra.mxu0 0.0
    %446 = vmatprep.subr.mxu0 0.0
    %447 = vmatpush2.xpose.msra.mxu0 0.0
    %448 = vmatprep.subr.mxu0 0.0
    %449 = vmatpush2.xpose.msra.mxu0 0.0
    %450 = vmatprep.subr.mxu0 0.0
    %451 = vmatpush2.xpose.msra.mxu0 0.0
    %452 = vmatprep.subr.mxu0 0.0
    %453 = vmatpush2.xpose.msra.mxu0 0.0
    %454 = vmatprep.subr.mxu0 0.0
    %455 = vmatpush2.xpose.msra.mxu0 0.0
    %456 = vmatprep.subr.mxu0 0.0
    %457 = vmatpush2.xpose.msra.mxu0 0.0
    %458 = vmatprep.subr.mxu0 0.0
    %459 = vmatpush2.xpose.msra.mxu0 0.0
    %460 = vmatprep.subr.mxu0 0.0
    %461 = vmatpush2.xpose.msra.mxu0 0.0
    %462 = vmatprep.subr.mxu0 0.0
    %463 = vmatpush2.xpose.msra.mxu0 0.0
    %464 = vmatprep.subr.mxu0 0.0
    %465 = vmatpush2.xpose.msra.mxu0 0.0
    %466 = vmatprep.subr.mxu0 0.0
    %467 = vmatpush2.xpose.msra.mxu0 0.0
    %468 = vmatprep.mubr.f32.mxu0 0.0
    %469 = vmatmul.mubr.f32.gmra.mxu0 %v399
    %v470 = vpop.f32.mrf.mxu0
    %v471 = vadd.f32 %v396, %v470
    %v472 = vpop.f32.mrf.mxu0
    %473 = vdwg.mxu0
    %vm474 = vcmask 57344
    %475 = vst.msk [vmem:[#allocation3] sm:$0x1] %vm474, %v471
    // Predicated region
    $region38: #{tpu_custom_call.1} parent=1 // pred_check
      _
    $region39: #{tpu_custom_call.1} parent=1 // pred_check_branch
      %477 = sbr.rel (0) target = $region41
    $region40: #{tpu_custom_call.1} parent=1 // pred_region
      %s479 = ssub.s32 16, 16
      %480 = vsyncadd [#allocation4], %s479
      %s482 = sshll.u32 [#allocation3], 4
      %s483 = int_to_ptr.vmem [resolvable:$true] %s482
      %485 = dma.vmem_to_hbm [thread:$0]  %s483, 16, %s9, [#allocation4]
    $region41: #{tpu_custom_call.1} parent=1 // pred_fallthru
      _
    // Predicated region
    $region42: #{tpu_custom_call.1} parent=1 // pred_check
      _
    $region43: #{tpu_custom_call.1} parent=1 // pred_check_branch
      %487 = sbr.rel (0) target = $region45
    $region44: #{tpu_custom_call.1} parent=1 // pred_region
      %488 = dma.done [#allocation4], 16
    $region45: #{tpu_custom_call.1} parent=1 // pred_fallthru
      _
    %489 = vsyncpa [#allocation4], 1

</llo_original>
